<compile_context>
chip_gen: v7x
topology: tpu7x:2x2x1
jax: 0.10.0
libtpu: 0.0.40
codegen_flags: <defaults>
</compile_context>

<pallas_src>
import functools

import jax
import jax.numpy as jnp
from jax.experimental import pallas as pl
from jax.experimental.pallas import tpu as pltpu


def valuenet_kernel(inp_ref, w_ref, b_ref, o_ref, *, width, obs_space, batch):
    # inp_ref : SMEM (2*B,)  int32 -- flattened (row, col) pairs
    # w_ref   : SMEM (OBS,)  f32   -- fc1.weight row 0 (PyTorch (out=1, in) layout)
    # b_ref   : SMEM (1,)    f32   -- fc1.bias
    # o_ref   : SMEM (B,)    f32   -- per-sample value
    #
    # Pure scalar-ALU path: per sample one smul+sadd for the index, one clamp,
    # one dynamic SMEM load for the gather, one add for the bias, one store.
    bias = b_ref[0]

    def body(b, carry):
        idx = inp_ref[2 * b] * width + inp_ref[2 * b + 1]
        # Match jax.nn.one_hot / F.one_hot-on-valid-range semantics: an index
        # outside [0, obs_space) selects no weight column -> contribution 0.
        in_range = jnp.logical_and(idx >= 0, idx < obs_space)
        safe_idx = jnp.clip(idx, 0, obs_space - 1)
        contrib = jnp.where(in_range, w_ref[safe_idx], jnp.float32(0.0))
        o_ref[b] = contrib + bias
        return carry

    jax.lax.fori_loop(0, batch, body, 0, unroll=True)


def value_net_forward_batch(inp, weight, bias, *, width):
    """Batched forward.

    inp    : int32 (B, 2) of (row, col) grid coordinates.
    weight : (1, obs_space) float32 (PyTorch nn.Linear layout).
    bias   : (1, 1) or (1,) float32.
    Returns (B, 1) float32, matching nn.Linear(one_hot(row*width+col)) per row.
    """
    batch = inp.shape[0]
    obs_space = weight.shape[-1]

    out = pl.pallas_call(
        functools.partial(
            valuenet_kernel, width=width, obs_space=obs_space, batch=batch
        ),
        out_shape=jax.ShapeDtypeStruct((batch,), jnp.float32),
        in_specs=[
            pl.BlockSpec(memory_space=pltpu.SMEM),  # (2B,) int32 indices
            pl.BlockSpec(memory_space=pltpu.SMEM),  # (obs,) weight
            pl.BlockSpec(memory_space=pltpu.SMEM),  # (1,)   bias
        ],
        out_specs=pl.BlockSpec(memory_space=pltpu.SMEM),
        cost_estimate=pl.CostEstimate(
            flops=2 * batch,
            transcendentals=0,
            bytes_accessed=4 * obs_space + 4 + 8 * batch + 4 * batch,
        ),
    )(
        inp.reshape(-1).astype(jnp.int32),
        weight.reshape(-1).astype(jnp.float32),
        bias.reshape(-1).astype(jnp.float32),
    )
    return out.reshape(batch, 1)


def value_net_forward(inp, weight, bias, *, width):
    """Module-faithful single-sample forward: inp (2,) -> (1, 1)."""
    return value_net_forward_batch(inp.reshape(1, 2), weight, bias, width=width)


def reference_forward_batch(inp, weight, bias, *, width, obs_space):
    sq_inp = inp[:, 0] * width + inp[:, 1]
    onehot = jax.nn.one_hot(sq_inp, obs_space, dtype=jnp.float32)  # (B, obs)
    return onehot @ weight.T + bias.reshape(1, 1)  # (B, 1)


if __name__ == "__main__":
    height, width = 8, 16
    obs_space = height * width  # 128
    batch = 8

    key = jax.random.PRNGKey(0)
    k_row, k_col, k_bias, k_w = jax.random.split(key, 4)

    # Module-faithful parameters: weight zero-initialized, bias with a
    # PyTorch-style uniform(-1/sqrt(in), 1/sqrt(in)) init.
    weight = jnp.zeros((1, obs_space), dtype=jnp.float32)
    bound = 1.0 / jnp.sqrt(jnp.float32(obs_space))
    bias = jax.random.uniform(k_bias, (1, 1), jnp.float32, -bound, bound)

    # Deterministic batch of (row, col) grid coordinates.
    rows = jax.random.randint(k_row, (batch,), 0, height, dtype=jnp.int32)
    cols = jax.random.randint(k_col, (batch,), 0, width, dtype=jnp.int32)
    inp = jnp.stack([rows, cols], axis=1)  # (B, 2)

    # 1) Module-faithful check (zero weight -> every output == bias).
    out = jax.block_until_ready(
        value_net_forward_batch(inp, weight, bias, width=width))
    ref = reference_forward_batch(inp, weight, bias, width=width,
                                  obs_space=obs_space)
    assert out.shape == (batch, 1)
    assert jnp.allclose(out, ref, atol=1e-6), (out, ref)

    # 2) Non-zero weight: exercises the per-sample gather path.
    weight_nz = jax.random.normal(k_w, (1, obs_space), dtype=jnp.float32)
    out_nz = jax.block_until_ready(
        value_net_forward_batch(inp, weight_nz, bias, width=width))
    ref_nz = reference_forward_batch(inp, weight_nz, bias, width=width,
                                     obs_space=obs_space)
    assert jnp.allclose(out_nz, ref_nz, atol=1e-6), (out_nz, ref_nz)

    # 3) Unbatched, module-style call (inp is a single (row, col) pair).
    out_single = jax.block_until_ready(
        value_net_forward(inp[0], weight_nz, bias, width=width))
    assert out_single.shape == (1, 1)
    assert jnp.allclose(out_single, ref_nz[:1], atol=1e-6), (out_single, ref_nz[:1])

    # 4) Out-of-range index matches one_hot semantics (contribution 0 -> bias).
    inp_oob = inp.at[0].set(jnp.array([height, width - 1], dtype=jnp.int32))
    out_oob = jax.block_until_ready(
        value_net_forward_batch(inp_oob, weight_nz, bias, width=width))
    ref_oob = reference_forward_batch(inp_oob, weight_nz, bias, width=width,
                                      obs_space=obs_space)
    assert jnp.allclose(out_oob, ref_oob, atol=1e-6), (out_oob, ref_oob)

    print("KERNEL_OK")
</pallas_src>

<mosaic_0001>
module attributes {stable_mosaic.version = 11 : i64} {
  func.func @valuenet_kernel(%arg0: memref<16xi32, #tpu.memory_space<smem>>, %arg1: memref<128xf32, #tpu.memory_space<smem>>, %arg2: memref<1xf32, #tpu.memory_space<smem>>, %arg3: memref<8xf32, #tpu.memory_space<smem>>) attributes {dimension_semantics = [], scalar_prefetch = 0 : i64, scratch_operands = 0 : i64, tpu.core_type = #tpu.core_type<tc>} {
    %c0 = arith.constant 0 : index
    %0 = memref.load %arg2[%c0] : memref<1xf32, #tpu.memory_space<smem>>
    %c0_i32 = arith.constant 0 : i32
    %c2_i32 = arith.constant 2 : i32
    %1 = arith.muli %c2_i32, %c0_i32 : i32
    %2 = arith.index_cast %1 : i32 to index
    %3 = memref.load %arg0[%2] : memref<16xi32, #tpu.memory_space<smem>>
    %c16_i32 = arith.constant 16 : i32
    %4 = arith.muli %3, %c16_i32 : i32
    %c2_i32_0 = arith.constant 2 : i32
    %5 = arith.muli %c2_i32_0, %c0_i32 : i32
    %c1_i32 = arith.constant 1 : i32
    %6 = arith.addi %5, %c1_i32 : i32
    %7 = arith.index_cast %6 : i32 to index
    %8 = memref.load %arg0[%7] : memref<16xi32, #tpu.memory_space<smem>>
    %9 = arith.addi %4, %8 : i32
    %c0_i32_1 = arith.constant 0 : i32
    %10 = arith.cmpi sge, %9, %c0_i32_1 : i32
    %c128_i32 = arith.constant 128 : i32
    %11 = arith.cmpi slt, %9, %c128_i32 : i32
    %12 = arith.andi %10, %11 : i1
    %c0_i32_2 = arith.constant 0 : i32
    %c127_i32 = arith.constant 127 : i32
    %13 = arith.maxsi %c0_i32_2, %9 : i32
    %14 = arith.minsi %c127_i32, %13 : i32
    %15 = arith.index_cast %14 : i32 to index
    %16 = memref.load %arg1[%15] : memref<128xf32, #tpu.memory_space<smem>>
    %cst = arith.constant 0.000000e+00 : f32
    %17 = arith.select %12, %16, %cst : f32
    %18 = arith.addf %17, %0 : f32
    %19 = arith.index_cast %c0_i32 : i32 to index
    %20 = memref.load %arg3[%19] : memref<8xf32, #tpu.memory_space<smem>>
    memref.store %18, %arg3[%19] : memref<8xf32, #tpu.memory_space<smem>>
    %c1_i32_3 = arith.constant 1 : i32
    %c2_i32_4 = arith.constant 2 : i32
    %21 = arith.muli %c2_i32_4, %c1_i32_3 : i32
    %22 = arith.index_cast %21 : i32 to index
    %23 = memref.load %arg0[%22] : memref<16xi32, #tpu.memory_space<smem>>
    %c16_i32_5 = arith.constant 16 : i32
    %24 = arith.muli %23, %c16_i32_5 : i32
    %c2_i32_6 = arith.constant 2 : i32
    %25 = arith.muli %c2_i32_6, %c1_i32_3 : i32
    %c1_i32_7 = arith.constant 1 : i32
    %26 = arith.addi %25, %c1_i32_7 : i32
    %27 = arith.index_cast %26 : i32 to index
    %28 = memref.load %arg0[%27] : memref<16xi32, #tpu.memory_space<smem>>
    %29 = arith.addi %24, %28 : i32
    %c0_i32_8 = arith.constant 0 : i32
    %30 = arith.cmpi sge, %29, %c0_i32_8 : i32
    %c128_i32_9 = arith.constant 128 : i32
    %31 = arith.cmpi slt, %29, %c128_i32_9 : i32
    %32 = arith.andi %30, %31 : i1
    %c0_i32_10 = arith.constant 0 : i32
    %c127_i32_11 = arith.constant 127 : i32
    %33 = arith.maxsi %c0_i32_10, %29 : i32
    %34 = arith.minsi %c127_i32_11, %33 : i32
    %35 = arith.index_cast %34 : i32 to index
    %36 = memref.load %arg1[%35] : memref<128xf32, #tpu.memory_space<smem>>
    %cst_12 = arith.constant 0.000000e+00 : f32
    %37 = arith.select %32, %36, %cst_12 : f32
    %38 = arith.addf %37, %0 : f32
    %39 = arith.index_cast %c1_i32_3 : i32 to index
    %40 = memref.load %arg3[%39] : memref<8xf32, #tpu.memory_space<smem>>
    memref.store %38, %arg3[%39] : memref<8xf32, #tpu.memory_space<smem>>
    %c2_i32_13 = arith.constant 2 : i32
    %c2_i32_14 = arith.constant 2 : i32
    %41 = arith.muli %c2_i32_14, %c2_i32_13 : i32
    %42 = arith.index_cast %41 : i32 to index
    %43 = memref.load %arg0[%42] : memref<16xi32, #tpu.memory_space<smem>>
    %c16_i32_15 = arith.constant 16 : i32
    %44 = arith.muli %43, %c16_i32_15 : i32
    %c2_i32_16 = arith.constant 2 : i32
    %45 = arith.muli %c2_i32_16, %c2_i32_13 : i32
    %c1_i32_17 = arith.constant 1 : i32
    %46 = arith.addi %45, %c1_i32_17 : i32
    %47 = arith.index_cast %46 : i32 to index
    %48 = memref.load %arg0[%47] : memref<16xi32, #tpu.memory_space<smem>>
    %49 = arith.addi %44, %48 : i32
    %c0_i32_18 = arith.constant 0 : i32
    %50 = arith.cmpi sge, %49, %c0_i32_18 : i32
    %c128_i32_19 = arith.constant 128 : i32
    %51 = arith.cmpi slt, %49, %c128_i32_19 : i32
    %52 = arith.andi %50, %51 : i1
    %c0_i32_20 = arith.constant 0 : i32
    %c127_i32_21 = arith.constant 127 : i32
    %53 = arith.maxsi %c0_i32_20, %49 : i32
    %54 = arith.minsi %c127_i32_21, %53 : i32
    %55 = arith.index_cast %54 : i32 to index
    %56 = memref.load %arg1[%55] : memref<128xf32, #tpu.memory_space<smem>>
    %cst_22 = arith.constant 0.000000e+00 : f32
    %57 = arith.select %52, %56, %cst_22 : f32
    %58 = arith.addf %57, %0 : f32
    %59 = arith.index_cast %c2_i32_13 : i32 to index
    %60 = memref.load %arg3[%59] : memref<8xf32, #tpu.memory_space<smem>>
    memref.store %58, %arg3[%59] : memref<8xf32, #tpu.memory_space<smem>>
    %c3_i32 = arith.constant 3 : i32
    %c2_i32_23 = arith.constant 2 : i32
    %61 = arith.muli %c2_i32_23, %c3_i32 : i32
    %62 = arith.index_cast %61 : i32 to index
    %63 = memref.load %arg0[%62] : memref<16xi32, #tpu.memory_space<smem>>
    %c16_i32_24 = arith.constant 16 : i32
    %64 = arith.muli %63, %c16_i32_24 : i32
    %c2_i32_25 = arith.constant 2 : i32
    %65 = arith.muli %c2_i32_25, %c3_i32 : i32
    %c1_i32_26 = arith.constant 1 : i32
    %66 = arith.addi %65, %c1_i32_26 : i32
    %67 = arith.index_cast %66 : i32 to index
    %68 = memref.load %arg0[%67] : memref<16xi32, #tpu.memory_space<smem>>
    %69 = arith.addi %64, %68 : i32
    %c0_i32_27 = arith.constant 0 : i32
    %70 = arith.cmpi sge, %69, %c0_i32_27 : i32
    %c128_i32_28 = arith.constant 128 : i32
    %71 = arith.cmpi slt, %69, %c128_i32_28 : i32
    %72 = arith.andi %70, %71 : i1
    %c0_i32_29 = arith.constant 0 : i32
    %c127_i32_30 = arith.constant 127 : i32
    %73 = arith.maxsi %c0_i32_29, %69 : i32
    %74 = arith.minsi %c127_i32_30, %73 : i32
    %75 = arith.index_cast %74 : i32 to index
    %76 = memref.load %arg1[%75] : memref<128xf32, #tpu.memory_space<smem>>
    %cst_31 = arith.constant 0.000000e+00 : f32
    %77 = arith.select %72, %76, %cst_31 : f32
    %78 = arith.addf %77, %0 : f32
    %79 = arith.index_cast %c3_i32 : i32 to index
    %80 = memref.load %arg3[%79] : memref<8xf32, #tpu.memory_space<smem>>
    memref.store %78, %arg3[%79] : memref<8xf32, #tpu.memory_space<smem>>
    %c4_i32 = arith.constant 4 : i32
    %c2_i32_32 = arith.constant 2 : i32
    %81 = arith.muli %c2_i32_32, %c4_i32 : i32
    %82 = arith.index_cast %81 : i32 to index
    %83 = memref.load %arg0[%82] : memref<16xi32, #tpu.memory_space<smem>>
    %c16_i32_33 = arith.constant 16 : i32
    %84 = arith.muli %83, %c16_i32_33 : i32
    %c2_i32_34 = arith.constant 2 : i32
    %85 = arith.muli %c2_i32_34, %c4_i32 : i32
    %c1_i32_35 = arith.constant 1 : i32
    %86 = arith.addi %85, %c1_i32_35 : i32
    %87 = arith.index_cast %86 : i32 to index
    %88 = memref.load %arg0[%87] : memref<16xi32, #tpu.memory_space<smem>>
    %89 = arith.addi %84, %88 : i32
    %c0_i32_36 = arith.constant 0 : i32
    %90 = arith.cmpi sge, %89, %c0_i32_36 : i32
    %c128_i32_37 = arith.constant 128 : i32
    %91 = arith.cmpi slt, %89, %c128_i32_37 : i32
    %92 = arith.andi %90, %91 : i1
    %c0_i32_38 = arith.constant 0 : i32
    %c127_i32_39 = arith.constant 127 : i32
    %93 = arith.maxsi %c0_i32_38, %89 : i32
    %94 = arith.minsi %c127_i32_39, %93 : i32
    %95 = arith.index_cast %94 : i32 to index
    %96 = memref.load %arg1[%95] : memref<128xf32, #tpu.memory_space<smem>>
    %cst_40 = arith.constant 0.000000e+00 : f32
    %97 = arith.select %92, %96, %cst_40 : f32
    %98 = arith.addf %97, %0 : f32
    %99 = arith.index_cast %c4_i32 : i32 to index
    %100 = memref.load %arg3[%99] : memref<8xf32, #tpu.memory_space<smem>>
    memref.store %98, %arg3[%99] : memref<8xf32, #tpu.memory_space<smem>>
    %c5_i32 = arith.constant 5 : i32
    %c2_i32_41 = arith.constant 2 : i32
    %101 = arith.muli %c2_i32_41, %c5_i32 : i32
    %102 = arith.index_cast %101 : i32 to index
    %103 = memref.load %arg0[%102] : memref<16xi32, #tpu.memory_space<smem>>
    %c16_i32_42 = arith.constant 16 : i32
    %104 = arith.muli %103, %c16_i32_42 : i32
    %c2_i32_43 = arith.constant 2 : i32
    %105 = arith.muli %c2_i32_43, %c5_i32 : i32
    %c1_i32_44 = arith.constant 1 : i32
    %106 = arith.addi %105, %c1_i32_44 : i32
    %107 = arith.index_cast %106 : i32 to index
    %108 = memref.load %arg0[%107] : memref<16xi32, #tpu.memory_space<smem>>
    %109 = arith.addi %104, %108 : i32
    %c0_i32_45 = arith.constant 0 : i32
    %110 = arith.cmpi sge, %109, %c0_i32_45 : i32
    %c128_i32_46 = arith.constant 128 : i32
    %111 = arith.cmpi slt, %109, %c128_i32_46 : i32
    %112 = arith.andi %110, %111 : i1
    %c0_i32_47 = arith.constant 0 : i32
    %c127_i32_48 = arith.constant 127 : i32
    %113 = arith.maxsi %c0_i32_47, %109 : i32
    %114 = arith.minsi %c127_i32_48, %113 : i32
    %115 = arith.index_cast %114 : i32 to index
    %116 = memref.load %arg1[%115] : memref<128xf32, #tpu.memory_space<smem>>
    %cst_49 = arith.constant 0.000000e+00 : f32
    %117 = arith.select %112, %116, %cst_49 : f32
    %118 = arith.addf %117, %0 : f32
    %119 = arith.index_cast %c5_i32 : i32 to index
    %120 = memref.load %arg3[%119] : memref<8xf32, #tpu.memory_space<smem>>
    memref.store %118, %arg3[%119] : memref<8xf32, #tpu.memory_space<smem>>
    %c6_i32 = arith.constant 6 : i32
    %c2_i32_50 = arith.constant 2 : i32
    %121 = arith.muli %c2_i32_50, %c6_i32 : i32
    %122 = arith.index_cast %121 : i32 to index
    %123 = memref.load %arg0[%122] : memref<16xi32, #tpu.memory_space<smem>>
    %c16_i32_51 = arith.constant 16 : i32
    %124 = arith.muli %123, %c16_i32_51 : i32
    %c2_i32_52 = arith.constant 2 : i32
    %125 = arith.muli %c2_i32_52, %c6_i32 : i32
    %c1_i32_53 = arith.constant 1 : i32
    %126 = arith.addi %125, %c1_i32_53 : i32
    %127 = arith.index_cast %126 : i32 to index
    %128 = memref.load %arg0[%127] : memref<16xi32, #tpu.memory_space<smem>>
    %129 = arith.addi %124, %128 : i32
    %c0_i32_54 = arith.constant 0 : i32
    %130 = arith.cmpi sge, %129, %c0_i32_54 : i32
    %c128_i32_55 = arith.constant 128 : i32
    %131 = arith.cmpi slt, %129, %c128_i32_55 : i32
    %132 = arith.andi %130, %131 : i1
    %c0_i32_56 = arith.constant 0 : i32
    %c127_i32_57 = arith.constant 127 : i32
    %133 = arith.maxsi %c0_i32_56, %129 : i32
    %134 = arith.minsi %c127_i32_57, %133 : i32
    %135 = arith.index_cast %134 : i32 to index
    %136 = memref.load %arg1[%135] : memref<128xf32, #tpu.memory_space<smem>>
    %cst_58 = arith.constant 0.000000e+00 : f32
    %137 = arith.select %132, %136, %cst_58 : f32
    %138 = arith.addf %137, %0 : f32
    %139 = arith.index_cast %c6_i32 : i32 to index
    %140 = memref.load %arg3[%139] : memref<8xf32, #tpu.memory_space<smem>>
    memref.store %138, %arg3[%139] : memref<8xf32, #tpu.memory_space<smem>>
    %c7_i32 = arith.constant 7 : i32
    %c2_i32_59 = arith.constant 2 : i32
    %141 = arith.muli %c2_i32_59, %c7_i32 : i32
    %142 = arith.index_cast %141 : i32 to index
    %143 = memref.load %arg0[%142] : memref<16xi32, #tpu.memory_space<smem>>
    %c16_i32_60 = arith.constant 16 : i32
    %144 = arith.muli %143, %c16_i32_60 : i32
    %c2_i32_61 = arith.constant 2 : i32
    %145 = arith.muli %c2_i32_61, %c7_i32 : i32
    %c1_i32_62 = arith.constant 1 : i32
    %146 = arith.addi %145, %c1_i32_62 : i32
    %147 = arith.index_cast %146 : i32 to index
    %148 = memref.load %arg0[%147] : memref<16xi32, #tpu.memory_space<smem>>
    %149 = arith.addi %144, %148 : i32
    %c0_i32_63 = arith.constant 0 : i32
    %150 = arith.cmpi sge, %149, %c0_i32_63 : i32
    %c128_i32_64 = arith.constant 128 : i32
    %151 = arith.cmpi slt, %149, %c128_i32_64 : i32
    %152 = arith.andi %150, %151 : i1
    %c0_i32_65 = arith.constant 0 : i32
    %c127_i32_66 = arith.constant 127 : i32
    %153 = arith.maxsi %c0_i32_65, %149 : i32
    %154 = arith.minsi %c127_i32_66, %153 : i32
    %155 = arith.index_cast %154 : i32 to index
    %156 = memref.load %arg1[%155] : memref<128xf32, #tpu.memory_space<smem>>
    %cst_67 = arith.constant 0.000000e+00 : f32
    %157 = arith.select %152, %156, %cst_67 : f32
    %158 = arith.addf %157, %0 : f32
    %159 = arith.index_cast %c7_i32 : i32 to index
    %160 = memref.load %arg3[%159] : memref<8xf32, #tpu.memory_space<smem>>
    memref.store %158, %arg3[%159] : memref<8xf32, #tpu.memory_space<smem>>
    %c8_i32 = arith.constant 8 : i32
    return
  }
}

</mosaic_0001>

<llo_original>
// kernel: tpu_custom_call.1
$region0: #{tpu_custom_call.1}
  #allocation0 [shape = 'u32[]', space=smem, size = 0x4, offset = 0x4, fixed_abs, tag = 'smem constant byte address 0x4 - core index']
  #allocation1 [shape = 'u32[144,128]{1,0:T(1,128)}', space=vmem, size = 0x12000, scoped, tag = 'internal scratch']
  #allocation2 [shape = 'f32[1]{0:T(128)S(6)}', space=smem, size = 0x200, scoped, tag = 'scoped memory for tpu_custom_call.1']
  %s0 = inlined_call_operand.vmem [shape: s32[16], index: 0, kind: input, shape index: {}]
  %s1 = inlined_call_operand.vmem [shape: f32[128], index: 1, kind: input, shape index: {}]
  %s2 = inlined_call_operand.<no memory space> [shape: f32[1], index: 2, kind: input, shape index: {}]
  %s3 = inlined_call_operand.hbm [shape: f32[8], index: 3, kind: output, shape index: {}]
  %s4 = sld [smem:[#allocation0]]
  $region30: #{tpu_custom_call.1} parent=0
    _
  %s6 = ssub.s32 1, %s4
  %s7 = scalar_select 0, %s6, %s4
  %8 = sst [smem:[#allocation2]] %s2
  $region1: #{tpu_custom_call.1} parent=0
    #allocation3 [shape = 'u8[512]{0}', space=smem, size = 0x200, scoped, tag = 'input window, operand 0, single buffered']
    #allocation4 [shape = 's32[1]{0}', space=sflag, size = 0x4, scoped, tag = 'scoped memory for tpu_custom_call.1']
    #allocation5 [shape = 's32[1]{0}', space=sflag, size = 0x4, scoped, tag = 'scoped memory for tpu_custom_call.1']
    #allocation6 [shape = 'u8[512]{0}', space=smem, size = 0x200, scoped, tag = 'input window, operand 1, single buffered']
    #allocation7 [shape = 's32[1]{0}', space=sflag, size = 0x4, scoped, tag = 'scoped memory for tpu_custom_call.1']
    #allocation8 [shape = 'u8[512]{0}', space=smem, size = 0x200, scoped, tag = 'output window, operand 0, single buffered']
    %9 = vsyncpa [#allocation5], 0
    %10 = vsyncpa [#allocation7], 0
    %11 = vsyncpa [#allocation4], 0
    // Predicated region
    $region2: #{tpu_custom_call.1} parent=1 // pred_check
      _
    $region3: #{tpu_custom_call.1} parent=1 // pred_check_branch
      %13 = sbr.rel (0) target = $region5
    $region4: #{tpu_custom_call.1} parent=1 // pred_region
      %s15 = ssub.s32 16, 16
      %16 = vsyncadd [#allocation5], %s15
      %s18 = sshll.u32 %s0, 4
      %s19 = int_to_ptr.vmem [resolvable:$true] %s18
      %21 = dma.vmem_to_smem %s19, 16, [#allocation3], [#allocation5]
    $region5: #{tpu_custom_call.1} parent=1 // pred_fallthru
      _
    // Predicated region
    $region6: #{tpu_custom_call.1} parent=1 // pred_check
      _
    $region7: #{tpu_custom_call.1} parent=1 // pred_check_branch
      %23 = sbr.rel (0) target = $region9
    $region8: #{tpu_custom_call.1} parent=1 // pred_region
      %s25 = ssub.s32 16, 16
      %26 = vsyncadd [#allocation7], %s25
      %s28 = sshll.u32 %s1, 4
      %s29 = int_to_ptr.vmem [resolvable:$true] %s28
      %31 = dma.vmem_to_smem %s29, 16, [#allocation6], [#allocation7]
    $region9: #{tpu_custom_call.1} parent=1 // pred_fallthru
      _
    // Predicated region
    $region10: #{tpu_custom_call.1} parent=1 // pred_check
      _
    $region11: #{tpu_custom_call.1} parent=1 // pred_check_branch
      %33 = sbr.rel (0) target = $region13
    $region12: #{tpu_custom_call.1} parent=1 // pred_region
      _
    $region13: #{tpu_custom_call.1} parent=1 // pred_fallthru
      _
    // Predicated region
    $region14: #{tpu_custom_call.1} parent=1 // pred_check
      _
    $region15: #{tpu_custom_call.1} parent=1 // pred_check_branch
      %35 = sbr.rel (0) target = $region17
    $region16: #{tpu_custom_call.1} parent=1 // pred_region
      %36 = dma.done [#allocation5], 16
    $region17: #{tpu_custom_call.1} parent=1 // pred_fallthru
      _
    // Predicated region
    $region18: #{tpu_custom_call.1} parent=1 // pred_check
      _
    $region19: #{tpu_custom_call.1} parent=1 // pred_check_branch
      %38 = sbr.rel (0) target = $region21
    $region20: #{tpu_custom_call.1} parent=1 // pred_region
      %39 = dma.done [#allocation7], 16
    $region21: #{tpu_custom_call.1} parent=1 // pred_fallthru
      _
    %40 = sfence
    %s41 = sld [smem:[#allocation2]]
    %s42 = sld [smem:[#allocation3]]
    %s43 = smul.u32 %s42, 16
    %s44 = sld [smem:[#allocation3 + $0x1]]
    %s45 = sadd.s32 %s43, %s44
    %p46 = scmp.ge.s32.totalorder %s45, 0
    %p47 = scmp.lt.s32.totalorder %s45, 128
    %p48 = pnand %p46, %p47
    %p49 = pneg %p48
    %p50 = scmp.gt.s32.totalorder %s45, 0
    %s51 = scalar_select %p50, %s45, 0
    %p52 = scmp.lt.s32.totalorder %s51, 127
    %s53 = scalar_select %p52, %s51, 127
    %s54 = sld [smem:[#allocation6 + %s53]]
    %s55 = scalar_select %p49, %s54, 0.0
    %s56 = sadd.f32 %s55, %s41
    %s57 = scalar_lea.smem [#allocation8], 0
    %58 = sst [smem:[%s57]] %s56
    %s59 = sld [smem:[#allocation3 + $0x2]]
    %s60 = smul.u32 %s59, 16
    %s61 = sld [smem:[#allocation3 + $0x3]]
    %s62 = sadd.s32 %s60, %s61
    %p63 = scmp.ge.s32.totalorder %s62, 0
    %p64 = scmp.lt.s32.totalorder %s62, 128
    %p65 = pnand %p63, %p64
    %p66 = pneg %p65
    %p67 = scmp.gt.s32.totalorder %s62, 0
    %s68 = scalar_select %p67, %s62, 0
    %p69 = scmp.lt.s32.totalorder %s68, 127
    %s70 = scalar_select %p69, %s68, 127
    %s71 = sld [smem:[#allocation6 + %s70]]
    %s72 = scalar_select %p66, %s71, 0.0
    %s73 = sadd.f32 %s72, %s41
    %s74 = scalar_lea.smem [#allocation8], 1
    %75 = sst [smem:[%s74]] %s73
    %s76 = sld [smem:[#allocation3 + $0x4]]
    %s77 = smul.u32 %s76, 16
    %s78 = sld [smem:[#allocation3 + $0x5]]
    %s79 = sadd.s32 %s77, %s78
    %p80 = scmp.ge.s32.totalorder %s79, 0
    %p81 = scmp.lt.s32.totalorder %s79, 128
    %p82 = pnand %p80, %p81
    %p83 = pneg %p82
    %p84 = scmp.gt.s32.totalorder %s79, 0
    %s85 = scalar_select %p84, %s79, 0
    %p86 = scmp.lt.s32.totalorder %s85, 127
    %s87 = scalar_select %p86, %s85, 127
    %s88 = sld [smem:[#allocation6 + %s87]]
    %s89 = scalar_select %p83, %s88, 0.0
    %s90 = sadd.f32 %s89, %s41
    %s91 = scalar_lea.smem [#allocation8], 2
    %92 = sst [smem:[%s91]] %s90
    %s93 = sld [smem:[#allocation3 + $0x6]]
    %s94 = smul.u32 %s93, 16
    %s95 = sld [smem:[#allocation3 + $0x7]]
    %s96 = sadd.s32 %s94, %s95
    %p97 = scmp.ge.s32.totalorder %s96, 0
    %p98 = scmp.lt.s32.totalorder %s96, 128
    %p99 = pnand %p97, %p98
    %p100 = pneg %p99
    %p101 = scmp.gt.s32.totalorder %s96, 0
    %s102 = scalar_select %p101, %s96, 0
    %p103 = scmp.lt.s32.totalorder %s102, 127
    %s104 = scalar_select %p103, %s102, 127
    %s105 = sld [smem:[#allocation6 + %s104]]
    %s106 = scalar_select %p100, %s105, 0.0
    %s107 = sadd.f32 %s106, %s41
    %s108 = scalar_lea.smem [#allocation8], 3
    %109 = sst [smem:[%s108]] %s107
    %s110 = sld [smem:[#allocation3 + $0x8]]
    %s111 = smul.u32 %s110, 16
    %s112 = sld [smem:[#allocation3 + $0x9]]
    %s113 = sadd.s32 %s111, %s112
    %p114 = scmp.ge.s32.totalorder %s113, 0
    %p115 = scmp.lt.s32.totalorder %s113, 128
    %p116 = pnand %p114, %p115
    %p117 = pneg %p116
    %p118 = scmp.gt.s32.totalorder %s113, 0
    %s119 = scalar_select %p118, %s113, 0
    %p120 = scmp.lt.s32.totalorder %s119, 127
    %s121 = scalar_select %p120, %s119, 127
    %s122 = sld [smem:[#allocation6 + %s121]]
    %s123 = scalar_select %p117, %s122, 0.0
    %s124 = sadd.f32 %s123, %s41
    %s125 = scalar_lea.smem [#allocation8], 4
    %126 = sst [smem:[%s125]] %s124
    %s127 = sld [smem:[#allocation3 + $0xa]]
    %s128 = smul.u32 %s127, 16
    %s129 = sld [smem:[#allocation3 + $0xb]]
    %s130 = sadd.s32 %s128, %s129
    %p131 = scmp.ge.s32.totalorder %s130, 0
    %p132 = scmp.lt.s32.totalorder %s130, 128
    %p133 = pnand %p131, %p132
    %p134 = pneg %p133
    %p135 = scmp.gt.s32.totalorder %s130, 0
    %s136 = scalar_select %p135, %s130, 0
    %p137 = scmp.lt.s32.totalorder %s136, 127
    %s138 = scalar_select %p137, %s136, 127
    %s139 = sld [smem:[#allocation6 + %s138]]
    %s140 = scalar_select %p134, %s139, 0.0
    %s141 = sadd.f32 %s140, %s41
    %s142 = scalar_lea.smem [#allocation8], 5
    %143 = sst [smem:[%s142]] %s141
    %s144 = sld [smem:[#allocation3 + $0xc]]
    %s145 = smul.u32 %s144, 16
    %s146 = sld [smem:[#allocation3 + $0xd]]
    %s147 = sadd.s32 %s145, %s146
    %p148 = scmp.ge.s32.totalorder %s147, 0
    %p149 = scmp.lt.s32.totalorder %s147, 128
    %p150 = pnand %p148, %p149
    %p151 = pneg %p150
    %p152 = scmp.gt.s32.totalorder %s147, 0
    %s153 = scalar_select %p152, %s147, 0
    %p154 = scmp.lt.s32.totalorder %s153, 127
    %s155 = scalar_select %p154, %s153, 127
    %s156 = sld [smem:[#allocation6 + %s155]]
    %s157 = scalar_select %p151, %s156, 0.0
    %s158 = sadd.f32 %s157, %s41
    %s159 = scalar_lea.smem [#allocation8], 6
    %160 = sst [smem:[%s159]] %s158
    %s161 = sld [smem:[#allocation3 + $0xe]]
    %s162 = smul.u32 %s161, 16
    %s163 = sld [smem:[#allocation3 + $0xf]]
    %s164 = sadd.s32 %s162, %s163
    %p165 = scmp.ge.s32.totalorder %s164, 0
    %p166 = scmp.lt.s32.totalorder %s164, 128
    %p167 = pnand %p165, %p166
    %p168 = pneg %p167
    %p169 = scmp.gt.s32.totalorder %s164, 0
    %s170 = scalar_select %p169, %s164, 0
    %p171 = scmp.lt.s32.totalorder %s170, 127
    %s172 = scalar_select %p171, %s170, 127
    %s173 = sld [smem:[#allocation6 + %s172]]
    %s174 = scalar_select %p168, %s173, 0.0
    %s175 = sadd.f32 %s174, %s41
    %s176 = scalar_lea.smem [#allocation8], 7
    %177 = sst [smem:[%s176]] %s175
    // Predicated region
    $region22: #{tpu_custom_call.1} parent=1 // pred_check
      _
    $region23: #{tpu_custom_call.1} parent=1 // pred_check_branch
      %179 = sbr.rel (0) target = $region25
    $region24: #{tpu_custom_call.1} parent=1 // pred_region
      %s181 = ssub.s32 16, 16
      %182 = vsyncadd [#allocation4], %s181
      %185 = dma.smem_to_hbm [#allocation8], 16, %s3, [#allocation4]
    $region25: #{tpu_custom_call.1} parent=1 // pred_fallthru
      _
    // Predicated region
    $region26: #{tpu_custom_call.1} parent=1 // pred_check
      _
    $region27: #{tpu_custom_call.1} parent=1 // pred_check_branch
      %187 = sbr.rel (0) target = $region29
    $region28: #{tpu_custom_call.1} parent=1 // pred_region
      %188 = dma.done [#allocation4], 16
    $region29: #{tpu_custom_call.1} parent=1 // pred_fallthru
      _
    %189 = sfence
    %190 = vsyncpa [#allocation4], 1
    %191 = vsyncpa [#allocation5], 1
    %192 = vsyncpa [#allocation7], 1

</llo_original>
